<compile_context>
chip_gen: v5e
topology: v5e:2x2
jax: 0.10.0
libtpu: 0.0.40
codegen_flags: <defaults>
</compile_context>

<pallas_src>
import jax
import jax.numpy as jnp
from jax.experimental import pallas as pl
from jax.experimental.pallas import tpu as pltpu

BN_EPS = 1e-5


def _round_up(n, m):
    return ((n + m - 1) // m) * m


def _pick_output_tiling(output_size):
    """Lane-dense fc3 output tiling: >=256 wide (fills the 2x256 MXU on
    v6e/v7x), 512 preferred to amortize grid-step overhead, falling back to
    256 when 512 would force an extra half-tile of zero padding."""
    padded = _round_up(output_size, 256)
    if padded <= 512:
        tile_n = padded
    elif padded % 512 == 0:
        tile_n = 512
    else:
        tile_n = 256
    return _round_up(padded, tile_n), tile_n


def _vmem_limit(*buffer_bytes):
    """Explicit scoped-VMEM budget: sum of the kernel's blocks + headroom for
    compiler scratch/spills, clamped to [16 MiB (v5e scoped default),
    64 MiB (v7x physical per-TC)]."""
    total = sum(int(b) for b in buffer_bytes) + (4 << 20)
    total = _round_up(total, 1 << 20)
    return max(16 << 20, min(total, 64 << 20))


# --------------------------------------------------------------------------
# Kernel 1: hidden stack, executed exactly once (no grid).
#   h2 = relu(bn2(fc2(relu(bn1(fc1(x))))))   stored as bf16
# --------------------------------------------------------------------------
def _hidden_stack_kernel(x_ref, w1_ref, g1_ref, be1_ref,
                         w2_ref, g2_ref, be2_ref, h2_ref):
    bf16 = jnp.bfloat16

    # fc1 (bias exactly cancelled by train-mode BN) -> bn1 (batch stats) -> relu
    h1 = jnp.dot(x_ref[...], w1_ref[...], preferred_element_type=jnp.float32)
    m1 = jnp.mean(h1, axis=0, keepdims=True)
    d1 = h1 - m1                                   # reused for var + normalize
    v1 = jnp.mean(d1 * d1, axis=0, keepdims=True)  # biased variance
    scale1 = g1_ref[...] * jax.lax.rsqrt(v1 + BN_EPS)
    h1 = jnp.maximum(d1 * scale1 + be1_ref[...], 0.0)

    # fc2 (bias cancelled) -> bn2 (batch stats) -> relu
    h2 = jnp.dot(h1.astype(bf16), w2_ref[...], preferred_element_type=jnp.float32)
    m2 = jnp.mean(h2, axis=0, keepdims=True)
    d2 = h2 - m2
    v2 = jnp.mean(d2 * d2, axis=0, keepdims=True)
    scale2 = g2_ref[...] * jax.lax.rsqrt(v2 + BN_EPS)
    h2 = jnp.maximum(d2 * scale2 + be2_ref[...], 0.0)

    h2_ref[...] = h2.astype(h2_ref.dtype)


# --------------------------------------------------------------------------
# Kernel 2: fc3 streamed over lane-dense output-column tiles.
# --------------------------------------------------------------------------
def _fc3_kernel(h2_ref, w3_ref, b3_ref, o_ref):
    o_ref[...] = (
        jnp.dot(h2_ref[...], w3_ref[...], preferred_element_type=jnp.float32)
        + b3_ref[...]
    ).astype(o_ref.dtype)


def linear_decoder_forward(x, params):
    """x: (B, latent_dim) float32.  Returns (B, output_size) float32."""
    B, L = x.shape
    H1 = params["w1"].shape[1]
    H2 = params["w2"].shape[1]
    O = params["w3"].shape[1]

    Lp = _round_up(L, 128)
    H1p = _round_up(H1, 128)
    H2p = _round_up(H2, 128)
    Op, tile_n = _pick_output_tiling(O)
    Bp8 = _round_up(B, 8)

    def pad2(a, rows, cols, dtype=None):
        a = jnp.pad(a, ((0, rows - a.shape[0]), (0, cols - a.shape[1])))
        return a if dtype is None else a.astype(dtype)

    # Zero padding keeps every padded feature column exactly 0 end-to-end:
    # zero weight columns -> zero pre-BN activations; gamma=0, beta=0 -> zero
    # post-BN; zero w3/b3 columns -> zero outputs (sliced off below).
    xp = pad2(x, B, Lp, jnp.bfloat16)            # pre-cast: half the x DMA
    w1 = pad2(params["w1"], Lp, H1p, jnp.bfloat16)
    w2 = pad2(params["w2"], H1p, H2p, jnp.bfloat16)
    w3 = pad2(params["w3"], H2p, Op, jnp.bfloat16)
    g1 = pad2(params["g1"], 1, H1p)
    be1 = pad2(params["be1"], 1, H1p)
    g2 = pad2(params["g2"], 1, H2p)
    be2 = pad2(params["be2"], 1, H2p)
    b3 = pad2(params["b3"], 1, Op)
    # b1 / b2 are intentionally unused: a bias added immediately before
    # train-mode BatchNorm is exactly cancelled by the batch-mean subtraction.

    # ---- kernel 1: hidden stack, run once. No grid -> everything resident,
    # single-buffered (the large invariant weights live here, not in the loop).
    hidden_vmem = _vmem_limit(
        B * Lp * 2,                     # x (bf16)
        Lp * H1p * 2,                   # w1 (bf16)
        H1p * H2p * 2,                  # w2 (bf16)
        4 * 8 * max(H1p, H2p) * 4,      # gamma/beta rows (sublane-padded f32)
        B * H2p * 2,                    # h2 output (bf16)
        2 * Bp8 * H1p * 4,              # f32 h1/d1 temporaries
        2 * Bp8 * H2p * 4,              # f32 h2/d2 temporaries
    )
    h2 = pl.pallas_call(
        _hidden_stack_kernel,
        out_shape=jax.ShapeDtypeStruct((B, H2p), jnp.bfloat16),
        compiler_params=pltpu.CompilerParams(vmem_limit_bytes=hidden_vmem),
    )(xp, w1, g1, be1, w2, g2, be2)

    # ---- kernel 2: fc3 over a 1-D "parallel" grid of output-column tiles.
    # Only the (memory-bound) w3 stream + one matmul per step remain in the loop.
    n_tiles = Op // tile_n
    fc3_vmem = _vmem_limit(
        2 * B * H2p * 2,                # h2 (bf16; counted double conservatively)
        2 * H2p * tile_n * 2,           # w3 column tiles (bf16, double-buffered)
        2 * 8 * tile_n * 4,             # b3 tiles (f32, sublane-padded)
        2 * Bp8 * tile_n * 4,           # out tiles (f32, double-buffered)
    )
    out_padded = pl.pallas_call(
        _fc3_kernel,
        out_shape=jax.ShapeDtypeStruct((B, Op), jnp.float32),
        grid_spec=pltpu.PrefetchScalarGridSpec(
            num_scalar_prefetch=0,
            grid=(n_tiles,),
            in_specs=[
                # Same block index every step -> no re-DMA of h2.
                pl.BlockSpec((B, H2p), lambda j: (0, 0)),        # h2 (invariant)
                pl.BlockSpec((H2p, tile_n), lambda j: (0, j)),   # w3 column tile
                pl.BlockSpec((1, tile_n), lambda j: (0, j)),     # b3 tile
            ],
            out_specs=pl.BlockSpec((B, tile_n), lambda j: (0, j)),
        ),
        compiler_params=pltpu.CompilerParams(
            dimension_semantics=("parallel",),   # shards tiles across v7x TCs
            vmem_limit_bytes=fc3_vmem,
        ),
    )(h2, w3, b3)

    return out_padded[:, :O]


def init_params(key, latent_dim, hidden1, hidden2, output_size):
    """Deterministic init mimicking nn.Linear (uniform +-1/sqrt(fan_in)) and
    nn.BatchNorm1d (gamma=1, beta=0).  b1/b2 are kept for the reference even
    though the kernel provably does not need them (train-mode BN)."""
    ks = jax.random.split(key, 6)

    def lin(kw, kb, fan_in, fan_out):
        bound = 1.0 / jnp.sqrt(fan_in)
        w = jax.random.uniform(kw, (fan_in, fan_out), jnp.float32, -bound, bound)
        b = jax.random.uniform(kb, (1, fan_out), jnp.float32, -bound, bound)
        return w, b

    w1, b1 = lin(ks[0], ks[1], latent_dim, hidden1)
    w2, b2 = lin(ks[2], ks[3], hidden1, hidden2)
    w3, b3 = lin(ks[4], ks[5], hidden2, output_size)
    return {
        "w1": w1, "b1": b1,
        "g1": jnp.ones((1, hidden1), jnp.float32),
        "be1": jnp.zeros((1, hidden1), jnp.float32),
        "w2": w2, "b2": b2,
        "g2": jnp.ones((1, hidden2), jnp.float32),
        "be2": jnp.zeros((1, hidden2), jnp.float32),
        "w3": w3, "b3": b3,
    }


def _reference_pytorch_f32(x, p):
    """Exact PyTorch train-mode semantics (f32, including b1/b2)."""
    h = x @ p["w1"] + p["b1"]
    m = h.mean(0, keepdims=True)
    v = ((h - m) ** 2).mean(0, keepdims=True)
    h = jnp.maximum((h - m) * jax.lax.rsqrt(v + BN_EPS) * p["g1"] + p["be1"], 0.0)
    h = h @ p["w2"] + p["b2"]
    m = h.mean(0, keepdims=True)
    v = ((h - m) ** 2).mean(0, keepdims=True)
    h = jnp.maximum((h - m) * jax.lax.rsqrt(v + BN_EPS) * p["g2"] + p["be2"], 0.0)
    return h @ p["w3"] + p["b3"]


def _reference_mixed_precision(x, p):
    """Mirrors the kernel's numerics: bf16 dot operands, f32 accumulation and
    BN math, b1/b2 dropped (exactly cancelled by train-mode BN)."""
    bf = jnp.bfloat16
    w1, w2, w3 = (p[k].astype(bf) for k in ("w1", "w2", "w3"))
    h = jnp.dot(x.astype(bf), w1, preferred_element_type=jnp.float32)
    m = h.mean(0, keepdims=True)
    d = h - m
    v = (d * d).mean(0, keepdims=True)
    h = jnp.maximum(d * (p["g1"] * jax.lax.rsqrt(v + BN_EPS)) + p["be1"], 0.0)
    h = jnp.dot(h.astype(bf), w2, preferred_element_type=jnp.float32)
    m = h.mean(0, keepdims=True)
    d = h - m
    v = (d * d).mean(0, keepdims=True)
    h = jnp.maximum(d * (p["g2"] * jax.lax.rsqrt(v + BN_EPS)) + p["be2"], 0.0)
    return jnp.dot(h.astype(bf), w3, preferred_element_type=jnp.float32) + p["b3"]


if __name__ == "__main__":
    # Small shapes consistent with the module's forward: x is (batch, latent_dim).
    # NOTE: at these toy sizes the kernels are fixed-overhead / latency bound;
    # tune tile_n / VMEM budgets at production shapes.
    batch, latent_dim, hidden1, hidden2, output_size = 8, 16, 32, 32, 64

    key = jax.random.PRNGKey(0)
    k_x, k_p = jax.random.split(key)
    x = jax.random.normal(k_x, (batch, latent_dim), jnp.float32)
    params = init_params(k_p, latent_dim, hidden1, hidden2, output_size)

    out = jax.block_until_ready(linear_decoder_forward(x, params))
    assert out.shape == (batch, output_size)

    # Tight check: kernel matches its own mixed-precision math.
    ref_mp = _reference_mixed_precision(x, params)
    assert jnp.allclose(out, ref_mp, atol=1e-3, rtol=1e-3), float(
        jnp.max(jnp.abs(out - ref_mp)))

    # Semantics check: matches PyTorch f32 train-mode forward within bf16
    # matmul precision (weights/activation operands are bf16 by design —
    # explicit precision contract for this decoder).
    ref_f32 = _reference_pytorch_f32(x, params)
    assert jnp.allclose(out, ref_f32, atol=5e-2, rtol=5e-2), float(
        jnp.max(jnp.abs(out - ref_f32)))

    # TODO(synk): CBPLinear (continual_backprop=True branch) is a stateful
    # training-time unit-replacement regularizer with no clean Pallas forward
    # equivalent; only the default (non-CBP) Sequential path is implemented.
    print("KERNEL_OK")
</pallas_src>

<mosaic_0001>
module attributes {stable_mosaic.version = 11 : i64} {
  func.func @_hidden_stack_kernel(%arg0: memref<8x128xbf16, #tpu.memory_space<vmem>>, %arg1: memref<128x128xbf16, #tpu.memory_space<vmem>>, %arg2: memref<1x128xf32, #tpu.memory_space<vmem>>, %arg3: memref<1x128xf32, #tpu.memory_space<vmem>>, %arg4: memref<128x128xbf16, #tpu.memory_space<vmem>>, %arg5: memref<1x128xf32, #tpu.memory_space<vmem>>, %arg6: memref<1x128xf32, #tpu.memory_space<vmem>>, %arg7: memref<8x128xbf16, #tpu.memory_space<vmem>>) attributes {dimension_semantics = [], scalar_prefetch = 0 : i64, scratch_operands = 0 : i64, tpu.core_type = #tpu.core_type<tc>} {
    %c0 = arith.constant 0 : index
    %c0_0 = arith.constant 0 : index
    %0 = vector.load %arg0[%c0, %c0_0] : memref<8x128xbf16, #tpu.memory_space<vmem>>, vector<8x128xbf16>
    %c0_1 = arith.constant 0 : index
    %c0_2 = arith.constant 0 : index
    %1 = vector.load %arg1[%c0_1, %c0_2] : memref<128x128xbf16, #tpu.memory_space<vmem>>, vector<128x128xbf16>
    %cst = arith.constant dense<0.000000e+00> : vector<8x128xf32>
    %2 = tpu.matmul %0, %1, %cst {dimension_numbers = #tpu.dot_dimension_numbers<[1], [0], [0], [1], [0, 0, 1, 1], [], []>} : vector<8x128xbf16>, vector<128x128xbf16>, vector<8x128xf32> -> vector<8x128xf32>
    %cst_3 = arith.constant dense<0.000000e+00> : vector<128xf32>
    %3 = vector.multi_reduction <add>, %2, %cst_3 [0] : vector<8x128xf32> to vector<128xf32>
    %4 = vector.shape_cast %3 : vector<128xf32> to vector<1x128xf32>
    %cst_4 = arith.constant 8.000000e+00 : f32
    %5 = vector.broadcast %cst_4 : f32 to vector<1x128xf32>
    %6 = arith.divf %4, %5 : vector<1x128xf32>
    %7 = vector.broadcast %6 : vector<1x128xf32> to vector<8x128xf32>
    %8 = arith.subf %2, %7 : vector<8x128xf32>
    %9 = arith.mulf %8, %8 : vector<8x128xf32>
    %cst_5 = arith.constant dense<0.000000e+00> : vector<128xf32>
    %10 = vector.multi_reduction <add>, %9, %cst_5 [0] : vector<8x128xf32> to vector<128xf32>
    %11 = vector.shape_cast %10 : vector<128xf32> to vector<1x128xf32>
    %cst_6 = arith.constant 8.000000e+00 : f32
    %12 = vector.broadcast %cst_6 : f32 to vector<1x128xf32>
    %13 = arith.divf %11, %12 : vector<1x128xf32>
    %c0_7 = arith.constant 0 : index
    %c0_8 = arith.constant 0 : index
    %14 = vector.load %arg2[%c0_7, %c0_8] : memref<1x128xf32, #tpu.memory_space<vmem>>, vector<1x128xf32>
    %cst_9 = arith.constant 9.99999974E-6 : f32
    %15 = vector.broadcast %cst_9 : f32 to vector<1x128xf32>
    %16 = arith.addf %13, %15 : vector<1x128xf32>
    %17 = math.rsqrt %16 : vector<1x128xf32>
    %18 = arith.mulf %14, %17 : vector<1x128xf32>
    %19 = vector.broadcast %18 : vector<1x128xf32> to vector<8x128xf32>
    %20 = arith.mulf %8, %19 : vector<8x128xf32>
    %c0_10 = arith.constant 0 : index
    %c0_11 = arith.constant 0 : index
    %21 = vector.load %arg3[%c0_10, %c0_11] : memref<1x128xf32, #tpu.memory_space<vmem>>, vector<1x128xf32>
    %22 = vector.broadcast %21 : vector<1x128xf32> to vector<8x128xf32>
    %23 = arith.addf %20, %22 : vector<8x128xf32>
    %cst_12 = arith.constant 0.000000e+00 : f32
    %24 = vector.broadcast %cst_12 : f32 to vector<8x128xf32>
    %25 = arith.maximumf %23, %24 : vector<8x128xf32>
    %26 = arith.truncf %25 : vector<8x128xf32> to vector<8x128xbf16>
    %c0_13 = arith.constant 0 : index
    %c0_14 = arith.constant 0 : index
    %27 = vector.load %arg4[%c0_13, %c0_14] : memref<128x128xbf16, #tpu.memory_space<vmem>>, vector<128x128xbf16>
    %cst_15 = arith.constant dense<0.000000e+00> : vector<8x128xf32>
    %28 = tpu.matmul %26, %27, %cst_15 {dimension_numbers = #tpu.dot_dimension_numbers<[1], [0], [0], [1], [0, 0, 1, 1], [], []>} : vector<8x128xbf16>, vector<128x128xbf16>, vector<8x128xf32> -> vector<8x128xf32>
    %cst_16 = arith.constant dense<0.000000e+00> : vector<128xf32>
    %29 = vector.multi_reduction <add>, %28, %cst_16 [0] : vector<8x128xf32> to vector<128xf32>
    %30 = vector.shape_cast %29 : vector<128xf32> to vector<1x128xf32>
    %cst_17 = arith.constant 8.000000e+00 : f32
    %31 = vector.broadcast %cst_17 : f32 to vector<1x128xf32>
    %32 = arith.divf %30, %31 : vector<1x128xf32>
    %33 = vector.broadcast %32 : vector<1x128xf32> to vector<8x128xf32>
    %34 = arith.subf %28, %33 : vector<8x128xf32>
    %35 = arith.mulf %34, %34 : vector<8x128xf32>
    %cst_18 = arith.constant dense<0.000000e+00> : vector<128xf32>
    %36 = vector.multi_reduction <add>, %35, %cst_18 [0] : vector<8x128xf32> to vector<128xf32>
    %37 = vector.shape_cast %36 : vector<128xf32> to vector<1x128xf32>
    %cst_19 = arith.constant 8.000000e+00 : f32
    %38 = vector.broadcast %cst_19 : f32 to vector<1x128xf32>
    %39 = arith.divf %37, %38 : vector<1x128xf32>
    %c0_20 = arith.constant 0 : index
    %c0_21 = arith.constant 0 : index
    %40 = vector.load %arg5[%c0_20, %c0_21] : memref<1x128xf32, #tpu.memory_space<vmem>>, vector<1x128xf32>
    %cst_22 = arith.constant 9.99999974E-6 : f32
    %41 = vector.broadcast %cst_22 : f32 to vector<1x128xf32>
    %42 = arith.addf %39, %41 : vector<1x128xf32>
    %43 = math.rsqrt %42 : vector<1x128xf32>
    %44 = arith.mulf %40, %43 : vector<1x128xf32>
    %45 = vector.broadcast %44 : vector<1x128xf32> to vector<8x128xf32>
    %46 = arith.mulf %34, %45 : vector<8x128xf32>
    %c0_23 = arith.constant 0 : index
    %c0_24 = arith.constant 0 : index
    %47 = vector.load %arg6[%c0_23, %c0_24] : memref<1x128xf32, #tpu.memory_space<vmem>>, vector<1x128xf32>
    %48 = vector.broadcast %47 : vector<1x128xf32> to vector<8x128xf32>
    %49 = arith.addf %46, %48 : vector<8x128xf32>
    %cst_25 = arith.constant 0.000000e+00 : f32
    %50 = vector.broadcast %cst_25 : f32 to vector<8x128xf32>
    %51 = arith.maximumf %49, %50 : vector<8x128xf32>
    %52 = arith.truncf %51 : vector<8x128xf32> to vector<8x128xbf16>
    %c0_26 = arith.constant 0 : index
    %c0_27 = arith.constant 0 : index
    %53 = vector.load %arg7[%c0_26, %c0_27] : memref<8x128xbf16, #tpu.memory_space<vmem>>, vector<8x128xbf16>
    tpu.vector_store %arg7[%c0_26, %c0_27], %52 {strides = array<i32>} : memref<8x128xbf16, #tpu.memory_space<vmem>>, vector<8x128xbf16>,
    return
  }
}

</mosaic_0001>

<llo_original>
// kernel: tpu_custom_call.1
$region0: #{tpu_custom_call.1}
  #allocation0 [shape = 'u32[]', space=smem, size = 0x4, offset = 0x4, fixed_abs, tag = 'smem constant byte address 0x4 - core index']
  #allocation1 [shape = 'u32[72,128]{1,0:T(1,128)}', space=vmem, size = 0x9000, scoped, tag = 'internal scratch']
  %s0 = inlined_call_operand.hbm [shape: bf16[8,128], index: 0, kind: input, shape index: {}]
  %s1 = inlined_call_operand.hbm [shape: bf16[128,128], index: 1, kind: input, shape index: {}]
  %s2 = inlined_call_operand.vmem [shape: f32[1,128], index: 2, kind: input, shape index: {}]
  %s3 = inlined_call_operand.vmem [shape: f32[1,128], index: 3, kind: input, shape index: {}]
  %s4 = inlined_call_operand.hbm [shape: bf16[128,128], index: 4, kind: input, shape index: {}]
  %s5 = inlined_call_operand.vmem [shape: f32[1,128], index: 5, kind: input, shape index: {}]
  %s6 = inlined_call_operand.vmem [shape: f32[1,128], index: 6, kind: input, shape index: {}]
  %s7 = inlined_call_operand.hbm [shape: bf16[8,128], index: 7, kind: output, shape index: {}]
  %s8 = sld [smem:[#allocation0]]
  $region50: #{tpu_custom_call.1} parent=0
    _
  %s10 = ssub.s32 1, %s8
  %s11 = scalar_select 0, %s10, %s8
  $region1: #{tpu_custom_call.1} parent=0
    #allocation2 [shape = 'u8[2048]{0}', space=vmem, size = 0x800, scoped, tag = 'input window, operand 0, single buffered']
    #allocation3 [shape = 's32[1]{0}', space=sflag, size = 0x4, scoped, tag = 'scoped memory for tpu_custom_call.1']
    #allocation4 [shape = 's32[1]{0}', space=sflag, size = 0x4, scoped, tag = 'scoped memory for tpu_custom_call.1']
    #allocation5 [shape = 'u8[32768]{0}', space=vmem, size = 0x8000, scoped, tag = 'input window, operand 1, single buffered']
    #allocation6 [shape = 's32[1]{0}', space=sflag, size = 0x4, scoped, tag = 'scoped memory for tpu_custom_call.1']
    #allocation7 [shape = 'u8[32768]{0}', space=vmem, size = 0x8000, scoped, tag = 'input window, operand 4, single buffered']
    #allocation8 [shape = 'u8[2048]{0}', space=vmem, size = 0x800, scoped, tag = 'output window, operand 0, single buffered']
    %12 = vsyncpa [#allocation3], 0
    %13 = vsyncpa [#allocation6], 0
    %14 = vsyncpa [#allocation4], 0
    // Predicated region
    $region2: #{tpu_custom_call.1} parent=1 // pred_check
      _
    $region3: #{tpu_custom_call.1} parent=1 // pred_check_branch
      %16 = sbr.rel (0) target = $region5
    $region4: #{tpu_custom_call.1} parent=1 // pred_region
      %18 = vsyncadd [#allocation3], 0
      %s20 = sshll.u32 %s0, 4
      %s21 = int_to_ptr.hbm [resolvable:$true] %s20
      %s22 = sshll.u32 [#allocation2], 4
      %s23 = int_to_ptr.vmem [resolvable:$true] %s22
      %25 = dma.hbm_to_vmem [thread:$0]  %s21, 64, %s23, [#allocation3]
    $region5: #{tpu_custom_call.1} parent=1 // pred_fallthru
      _
    // Predicated region
    $region6: #{tpu_custom_call.1} parent=1 // pred_check
      _
    $region7: #{tpu_custom_call.1} parent=1 // pred_check_branch
      %27 = sbr.rel (0) target = $region9
    $region8: #{tpu_custom_call.1} parent=1 // pred_region
      %29 = vsyncadd [#allocation6], 0
      %s30 = sshll.u32 %s1, 4
      %s31 = int_to_ptr.hbm [resolvable:$true] %s30
      %s32 = sshll.u32 [#allocation5], 4
      %s33 = int_to_ptr.vmem [resolvable:$true] %s32
      %38 = dma.hbm_to_vmem [thread:$0]  %s31, 1024, %s33, [#allocation6], 64, 64, 4
    $region9: #{tpu_custom_call.1} parent=1 // pred_fallthru
      _
    // Predicated region
    $region10: #{tpu_custom_call.1} parent=1 // pred_check
      _
    $region11: #{tpu_custom_call.1} parent=1 // pred_check_branch
      %40 = sbr.rel (0) target = $region13
    $region12: #{tpu_custom_call.1} parent=1 // pred_region
      _
    $region13: #{tpu_custom_call.1} parent=1 // pred_fallthru
      _
    // Predicated region
    $region14: #{tpu_custom_call.1} parent=1 // pred_check
      _
    $region15: #{tpu_custom_call.1} parent=1 // pred_check_branch
      %42 = sbr.rel (0) target = $region17
    $region16: #{tpu_custom_call.1} parent=1 // pred_region
      _
    $region17: #{tpu_custom_call.1} parent=1 // pred_fallthru
      _
    // Predicated region
    $region18: #{tpu_custom_call.1} parent=1 // pred_check
      _
    $region19: #{tpu_custom_call.1} parent=1 // pred_check_branch
      %44 = sbr.rel (0) target = $region21
    $region20: #{tpu_custom_call.1} parent=1 // pred_region
      %46 = vsyncadd [#allocation6], 0
      %s47 = sshll.u32 %s4, 4
      %s48 = int_to_ptr.hbm [resolvable:$true] %s47
      %s49 = sshll.u32 [#allocation7], 4
      %s50 = int_to_ptr.vmem [resolvable:$true] %s49
      %55 = dma.hbm_to_vmem [thread:$0]  %s48, 1024, %s50, [#allocation6], 64, 64, 4
    $region21: #{tpu_custom_call.1} parent=1 // pred_fallthru
      _
    // Predicated region
    $region22: #{tpu_custom_call.1} parent=1 // pred_check
      _
    $region23: #{tpu_custom_call.1} parent=1 // pred_check_branch
      %57 = sbr.rel (0) target = $region25
    $region24: #{tpu_custom_call.1} parent=1 // pred_region
      _
    $region25: #{tpu_custom_call.1} parent=1 // pred_fallthru
      _
    // Predicated region
    $region26: #{tpu_custom_call.1} parent=1 // pred_check
      _
    $region27: #{tpu_custom_call.1} parent=1 // pred_check_branch
      %59 = sbr.rel (0) target = $region29
    $region28: #{tpu_custom_call.1} parent=1 // pred_region
      _
    $region29: #{tpu_custom_call.1} parent=1 // pred_fallthru
      _
    // Predicated region
    $region30: #{tpu_custom_call.1} parent=1 // pred_check
      _
    $region31: #{tpu_custom_call.1} parent=1 // pred_check_branch
      %61 = sbr.rel (0) target = $region33
    $region32: #{tpu_custom_call.1} parent=1 // pred_region
      %63 = dma.done [#allocation3], 64
    $region33: #{tpu_custom_call.1} parent=1 // pred_fallthru
      _
    // Predicated region
    $region34: #{tpu_custom_call.1} parent=1 // pred_check
      _
    $region35: #{tpu_custom_call.1} parent=1 // pred_check_branch
      %65 = sbr.rel (0) target = $region37
    $region36: #{tpu_custom_call.1} parent=1 // pred_region
      %67 = dma.done [#allocation6], 1024
    $region37: #{tpu_custom_call.1} parent=1 // pred_fallthru
      _
    // Predicated region
    $region38: #{tpu_custom_call.1} parent=1 // pred_check
      _
    $region39: #{tpu_custom_call.1} parent=1 // pred_check_branch
      %69 = sbr.rel (0) target = $region41
    $region40: #{tpu_custom_call.1} parent=1 // pred_region
      %71 = dma.done [#allocation6], 1024
    $region41: #{tpu_custom_call.1} parent=1 // pred_fallthru
      _
    %v72 = vld [vmem:[#allocation2] sm:$0xf]
    %v73 = vld [vmem:[#allocation5] sm:$0xf]
    %v74 = vld [vmem:[#allocation5 + $0x4] sm:$0xf]
    %v75 = vld [vmem:[#allocation5 + $0x8] sm:$0xf]
    %v76 = vld [vmem:[#allocation5 + $0xc] sm:$0xf]
    %v77 = vld [vmem:[#allocation5 + $0x10] sm:$0xf]
    %v78 = vld [vmem:[#allocation5 + $0x14] sm:$0xf]
    %v79 = vld [vmem:[#allocation5 + $0x18] sm:$0xf]
    %v80 = vld [vmem:[#allocation5 + $0x1c] sm:$0xf]
    %v81 = vld [vmem:[#allocation5 + $0x20] sm:$0xf]
    %v82 = vld [vmem:[#allocation5 + $0x24] sm:$0xf]
    %v83 = vld [vmem:[#allocation5 + $0x28] sm:$0xf]
    %v84 = vld [vmem:[#allocation5 + $0x2c] sm:$0xf]
    %v85 = vld [vmem:[#allocation5 + $0x30] sm:$0xf]
    %v86 = vld [vmem:[#allocation5 + $0x34] sm:$0xf]
    %v87 = vld [vmem:[#allocation5 + $0x38] sm:$0xf]
    %v88 = vld [vmem:[#allocation5 + $0x3c] sm:$0xf]
    %v105 = vunpack.c.l.b16 %v73
    %v106 = vunpack.c.l.b16 %v74
    %v107 = vunpack.c.l.b16 %v75
    %v108 = vunpack.c.l.b16 %v76
    %v109 = vunpack.c.l.b16 %v77
    %v110 = vunpack.c.l.b16 %v78
    %v111 = vunpack.c.l.b16 %v79
    %v112 = vunpack.c.l.b16 %v80
    %v113 = vunpack.c.l.b16 %v81
    %v114 = vunpack.c.l.b16 %v82
    %v115 = vunpack.c.l.b16 %v83
    %v116 = vunpack.c.l.b16 %v84
    %v117 = vunpack.c.l.b16 %v85
    %v118 = vunpack.c.l.b16 %v86
    %v119 = vunpack.c.l.b16 %v87
    %v120 = vunpack.c.l.b16 %v88
    %v121 = vpack.c.b16 %v106, %v105
    %v122 = vpack.c.b16 %v108, %v107
    %v123 = vpack.c.b16 %v110, %v109
    %v124 = vpack.c.b16 %v112, %v111
    %v125 = vpack.c.b16 %v114, %v113
    %v126 = vpack.c.b16 %v116, %v115
    %v127 = vpack.c.b16 %v118, %v117
    %v128 = vpack.c.b16 %v120, %v119
    %137 = vmatpush.bf16.msra.mxu0 %v128
    %138 = vmatpush.bf16.msra.mxu0 %v127
    %139 = vmatpush.bf16.msra.mxu0 %v126
    %140 = vmatpush.bf16.msra.mxu0 %v125
    %141 = vmatpush.bf16.msra.mxu0 %v124
    %142 = vmatpush.bf16.msra.mxu0 %v123
    %143 = vmatpush.bf16.msra.mxu0 %v122
    %144 = vmatpush.bf16.msra.mxu0 %v121
    %145 = vmatmul.bf16.gmra.mxu0 %v72
    %v146 = vpop.f32.mrf.mxu0
    %v147 = vadd.f32 0.0, %v146
    %v148 = vpop.f32.mrf.mxu0
    %149 = vdwg.mxu0
    %v150 = vrot.slane %v147, 4
    %v151 = vadd.f32 %v147, %v150
    %v152 = vrot.slane %v151, 2
    %v153 = vadd.f32 %v151, %v152
    %v154 = vrot.slane %v153, 1
    %v155 = vadd.f32 %v153, %v154
    %v156 = vrcp.pop 8.0
    %v157 = vmul.f32 8.0, %v156
    %v158 = vsub.f32 1.0, %v157
    %v159 = vmul.f32 %v156, %v158
    %v160 = vadd.f32 %v156, %v159
    %vm161 = vweird.f32 %v156
    %v162 = vsel %vm161, %v156, %v160
    %v163 = vmul.f32 %v155, %v162
    %v164 = vsub.f32 %v147, %v163
    %v165 = vmul.f32 %v164, %v164
    %v166 = vrot.slane %v165, 4
    %v167 = vadd.f32 %v165, %v166
    %v168 = vrot.slane %v167, 2
    %v169 = vadd.f32 %v167, %v168
    %v170 = vrot.slane %v169, 1
    %v171 = vadd.f32 %v169, %v170
    %v172 = vmul.f32 %v171, %v162
    %v173 = vld [vmem:[%s2] sm:$0x1]
    %v174 = vadd.f32 %v172, 1e-05
    %v175 = vrsqrt.pop %v174
    %v176 = vmul.f32 %v175, %v174
    %v177 = vmul.f32 %v176, %v175
    %v178 = vmul.f32 0.5, %v177
    %v179 = vsub.f32 1.5, %v178
    %v180 = vmul.f32 %v175, %v179
    %vm181 = vweird.f32 %v174
    %vm182 = vweird.f32 %v175
    %vm183 = vmor %vm181, %vm182
    %v184 = vsel %vm183, %v175, %v180
    %v185 = vmul.f32 %v173, %v184
    %v187 = vperm.slane %v185, 0
    %v189 = vmul.f32 %v164, %v187
    %v190 = vld [vmem:[%s3] sm:$0x1]
    %v192 = vperm.slane %v190, 0
    %v194 = vadd.f32 %v189, %v192
    %v195 = vmax.f32 %v194, 0.0
    %v196 = vpack.c.bf16 %v195, %v195
    %v197 = vld [vmem:[#allocation7] sm:$0xf]
    %v198 = vld [vmem:[#allocation7 + $0x4] sm:$0xf]
    %v199 = vld [vmem:[#allocation7 + $0x8] sm:$0xf]
    %v200 = vld [vmem:[#allocation7 + $0xc] sm:$0xf]
    %v201 = vld [vmem:[#allocation7 + $0x10] sm:$0xf]
    %v202 = vld [vmem:[#allocation7 + $0x14] sm:$0xf]
    %v203 = vld [vmem:[#allocation7 + $0x18] sm:$0xf]
    %v204 = vld [vmem:[#allocation7 + $0x1c] sm:$0xf]
    %v205 = vld [vmem:[#allocation7 + $0x20] sm:$0xf]
    %v206 = vld [vmem:[#allocation7 + $0x24] sm:$0xf]
    %v207 = vld [vmem:[#allocation7 + $0x28] sm:$0xf]
    %v208 = vld [vmem:[#allocation7 + $0x2c] sm:$0xf]
    %v209 = vld [vmem:[#allocation7 + $0x30] sm:$0xf]
    %v210 = vld [vmem:[#allocation7 + $0x34] sm:$0xf]
    %v211 = vld [vmem:[#allocation7 + $0x38] sm:$0xf]
    %v212 = vld [vmem:[#allocation7 + $0x3c] sm:$0xf]
    %v229 = vunpack.c.l.b16 %v197
    %v230 = vunpack.c.l.b16 %v198
    %v231 = vunpack.c.l.b16 %v199
    %v232 = vunpack.c.l.b16 %v200
    %v233 = vunpack.c.l.b16 %v201
    %v234 = vunpack.c.l.b16 %v202
    %v235 = vunpack.c.l.b16 %v203
    %v236 = vunpack.c.l.b16 %v204
    %v237 = vunpack.c.l.b16 %v205
    %v238 = vunpack.c.l.b16 %v206
    %v239 = vunpack.c.l.b16 %v207
    %v240 = vunpack.c.l.b16 %v208
    %v241 = vunpack.c.l.b16 %v209
    %v242 = vunpack.c.l.b16 %v210
    %v243 = vunpack.c.l.b16 %v211
    %v244 = vunpack.c.l.b16 %v212
    %v245 = vpack.c.b16 %v230, %v229
    %v246 = vpack.c.b16 %v232, %v231
    %v247 = vpack.c.b16 %v234, %v233
    %v248 = vpack.c.b16 %v236, %v235
    %v249 = vpack.c.b16 %v238, %v237
    %v250 = vpack.c.b16 %v240, %v239
    %v251 = vpack.c.b16 %v242, %v241
    %v252 = vpack.c.b16 %v244, %v243
    %261 = vmatpush.bf16.msra.mxu0 %v252
    %262 = vmatpush.bf16.msra.mxu0 %v251
    %263 = vmatpush.bf16.msra.mxu0 %v250
    %264 = vmatpush.bf16.msra.mxu0 %v249
    %265 = vmatpush.bf16.msra.mxu0 %v248
    %266 = vmatpush.bf16.msra.mxu0 %v247
    %267 = vmatpush.bf16.msra.mxu0 %v246
    %268 = vmatpush.bf16.msra.mxu0 %v245
    %269 = vmatmul.bf16.gmra.mxu0 %v196
    %v270 = vpop.f32.mrf.mxu0
    %v271 = vadd.f32 0.0, %v270
    %v272 = vpop.f32.mrf.mxu0
    %273 = vdwg.mxu0
    %v274 = vrot.slane %v271, 4
    %v275 = vadd.f32 %v271, %v274
    %v276 = vrot.slane %v275, 2
    %v277 = vadd.f32 %v275, %v276
    %v278 = vrot.slane %v277, 1
    %v279 = vadd.f32 %v277, %v278
    %v280 = vmul.f32 %v279, %v162
    %v281 = vsub.f32 %v271, %v280
    %v282 = vmul.f32 %v281, %v281
    %v283 = vrot.slane %v282, 4
    %v284 = vadd.f32 %v282, %v283
    %v285 = vrot.slane %v284, 2
    %v286 = vadd.f32 %v284, %v285
    %v287 = vrot.slane %v286, 1
    %v288 = vadd.f32 %v286, %v287
    %v289 = vmul.f32 %v288, %v162
    %v290 = vld [vmem:[%s5] sm:$0x1]
    %v291 = vadd.f32 %v289, 1e-05
    %v292 = vrsqrt.pop %v291
    %v293 = vmul.f32 %v292, %v291
    %v294 = vmul.f32 %v293, %v292
    %v295 = vmul.f32 0.5, %v294
    %v296 = vsub.f32 1.5, %v295
    %v297 = vmul.f32 %v292, %v296
    %vm298 = vweird.f32 %v291
    %vm299 = vweird.f32 %v292
    %vm300 = vmor %vm298, %vm299
    %v301 = vsel %vm300, %v292, %v297
    %v302 = vmul.f32 %v290, %v301
    %v304 = vperm.slane %v302, 0
    %v306 = vmul.f32 %v281, %v304
    %v307 = vld [vmem:[%s6] sm:$0x1]
    %v309 = vperm.slane %v307, 0
    %v311 = vadd.f32 %v306, %v309
    %v312 = vmax.f32 %v311, 0.0
    %v313 = vpack.c.bf16 %v312, %v312
    %314 = vst [vmem:[#allocation8] sm:$0xf] %v313
    // Predicated region
    $region42: #{tpu_custom_call.1} parent=1 // pred_check
      _
    $region43: #{tpu_custom_call.1} parent=1 // pred_check_branch
      %316 = sbr.rel (0) target = $region45
    $region44: #{tpu_custom_call.1} parent=1 // pred_region
      %318 = vsyncadd [#allocation4], 0
      %s320 = sshll.u32 [#allocation8], 4
      %s321 = int_to_ptr.vmem [resolvable:$true] %s320
      %s322 = sshll.u32 %s7, 4
      %s323 = int_to_ptr.hbm [resolvable:$true] %s322
      %325 = dma.vmem_to_hbm [thread:$0]  %s321, 64, %s323, [#allocation4]
    $region45: #{tpu_custom_call.1} parent=1 // pred_fallthru
      _
    // Predicated region
    $region46: #{tpu_custom_call.1} parent=1 // pred_check
      _
    $region47: #{tpu_custom_call.1} parent=1 // pred_check_branch
      %327 = sbr.rel (0) target = $region49
    $region48: #{tpu_custom_call.1} parent=1 // pred_region
      %329 = dma.done [#allocation4], 64
    $region49: #{tpu_custom_call.1} parent=1 // pred_fallthru
      _
    %330 = vsyncpa [#allocation3], 1
    %331 = vsyncpa [#allocation6], 1
    %332 = vsyncpa [#allocation4], 1

</llo_original>
